<compile_context>
chip_gen: v7x
topology: tpu7x:2x2x1
jax: 0.10.0
libtpu: 0.0.40
codegen_flags: <defaults>
</compile_context>

<pallas_src>
import functools

import jax
import jax.numpy as jnp
from jax.experimental import pallas as pl
from jax.experimental.pallas import tpu as pltpu

MEDIUM_SIZE = 16 * 16 + 8 * 8          # 320
LAYER_SIZES = [160, 64, 32, 16]
DIMS = [MEDIUM_SIZE, MEDIUM_SIZE // 2] + LAYER_SIZES[1:] + [10]
# DIMS = [320, 160, 64, 32, 16, 10]

TILE_B = 512                            # rows per grid step (multiple of 8/16)


def _round_up(n, m):
    return ((n + m - 1) // m) * m


def mlp_logsoftmax_kernel(x_ref, w1_ref, w2_ref, w3_ref, w4_ref, w5_ref, o_ref):
    # x tile arrives as bf16 (halves HBM traffic for the dominant input read).
    # Each layer: bf16 operands into the MXU, f32 accumulate, f32 ReLU.
    h = x_ref[...]
    for w_ref in (w1_ref, w2_ref, w3_ref, w4_ref, w5_ref):
        h = jnp.dot(h.astype(jnp.bfloat16), w_ref[...],
                    preferred_element_type=jnp.float32)
        h = jnp.maximum(h, 0.0)
    # Numerically stable log-softmax over the feature axis, all in f32.
    m = jnp.max(h, axis=1, keepdims=True)
    shifted = h - m
    lse = jnp.log(jnp.sum(jnp.exp(shifted), axis=1, keepdims=True))
    o_ref[...] = (shifted - lse).astype(o_ref.dtype)


def prepare_params(weights):
    """One-time param prep: PyTorch (out, in) -> (in, out), cast to bf16."""
    return tuple(jnp.asarray(w).T.astype(jnp.bfloat16) for w in weights)


@jax.jit
def medium_forward(x, wts):
    """x: (B, 320) f32; wts: tuple of 5 pre-transposed bf16 (in, out) weights."""
    b = x.shape[0]
    tile_b = min(TILE_B, _round_up(b, 8))
    b_pad = _round_up(b, tile_b)

    xb = x.astype(jnp.bfloat16)
    if b_pad != b:
        xb = jnp.pad(xb, ((0, b_pad - b), (0, 0)))

    grid = (b_pad // tile_b,)

    def w_spec(w):
        # Full-block, constant index_map -> weight stays resident in VMEM.
        return pl.BlockSpec(w.shape, lambda i: (0, 0))

    out = pl.pallas_call(
        mlp_logsoftmax_kernel,
        out_shape=jax.ShapeDtypeStruct((b_pad, DIMS[-1]), jnp.float32),
        grid=grid,
        in_specs=[pl.BlockSpec((tile_b, DIMS[0]), lambda i: (i, 0))]
        + [w_spec(w) for w in wts],
        out_specs=pl.BlockSpec((tile_b, DIMS[-1]), lambda i: (i, 0)),
        compiler_params=pltpu.CompilerParams(
            dimension_semantics=("parallel",)),
    )(xb, *wts)
    return out[:b]


def init_weights(key):
    """Deterministic init matching nn.Linear(out, in) weight shapes (bias=False)."""
    weights = []
    for i in range(len(DIMS) - 1):
        key, sub = jax.random.split(key)
        fan_in, fan_out = DIMS[i], DIMS[i + 1]
        bound = 1.0 / (fan_in ** 0.5)
        w = jax.random.uniform(sub, (fan_out, fan_in), jnp.float32, -bound, bound)
        weights.append(w)
    return weights


def reference_forward_f32(x, weights):
    """Pure f32 reference (matches the PyTorch module semantics)."""
    h = x
    for w in weights:
        h = jnp.maximum(h @ w.T, 0.0)
    return jax.nn.log_softmax(h, axis=1)


def reference_forward_mixed(x, weights):
    """Reference with the same bf16-at-MXU / f32-accumulate recipe as the kernel."""
    h = x
    for w in weights:
        h = jnp.dot(h.astype(jnp.bfloat16), w.T.astype(jnp.bfloat16),
                    preferred_element_type=jnp.float32)
        h = jnp.maximum(h, 0.0)
    return jax.nn.log_softmax(h, axis=1)


if __name__ == "__main__":
    key = jax.random.PRNGKey(0)
    kx, kw, kx2 = jax.random.split(key, 3)
    weights = init_weights(kw)
    wts = prepare_params(weights)

    # Small primary test: batch = 8 (single grid step).
    batch = 8
    x = jax.random.normal(kx, (batch, MEDIUM_SIZE), jnp.float32)
    out = jax.block_until_ready(medium_forward(x, wts))
    assert out.shape == (batch, 10)
    # Tight check against a reference using the same mixed precision.
    ref_mixed = reference_forward_mixed(x, weights)
    assert jnp.allclose(out, ref_mixed, atol=1e-3, rtol=1e-3)
    # Loose check against the pure-f32 (PyTorch-semantics) reference:
    # bf16 MXU operands introduce ~1e-2 level deviations.
    ref_f32 = reference_forward_f32(x, weights)
    assert jnp.allclose(out, ref_f32, atol=3e-2, rtol=3e-2)

    # Second test: batch not a multiple of the tile -> multi-step grid + padded tail.
    batch2 = 1037
    x2 = jax.random.normal(kx2, (batch2, MEDIUM_SIZE), jnp.float32)
    out2 = jax.block_until_ready(medium_forward(x2, wts))
    assert out2.shape == (batch2, 10)
    ref2_mixed = reference_forward_mixed(x2, weights)
    assert jnp.allclose(out2, ref2_mixed, atol=1e-3, rtol=1e-3)

    print("KERNEL_OK")
</pallas_src>

<mosaic_0001>
module attributes {stable_mosaic.version = 11 : i64} {
  func.func @mlp_logsoftmax_kernel(%arg0: i32, %arg1: memref<8x320xbf16, #tpu.memory_space<vmem>>, %arg2: memref<320x160xbf16, #tpu.memory_space<vmem>>, %arg3: memref<160x64xbf16, #tpu.memory_space<vmem>>, %arg4: memref<64x32xbf16, #tpu.memory_space<vmem>>, %arg5: memref<32x16xbf16, #tpu.memory_space<vmem>>, %arg6: memref<16x10xbf16, #tpu.memory_space<vmem>>, %arg7: memref<8x10xf32, #tpu.memory_space<vmem>>) attributes {dimension_semantics = [#tpu.dimension_semantics<parallel>], iteration_bounds = array<i64: 1>, scalar_prefetch = 0 : i64, scratch_operands = 0 : i64, tpu.core_type = #tpu.core_type<tc>, window_params = [{transform_indices = @transform_0, window_bounds = array<i64: 8, 320>}, {pipeline_mode = #tpu.pipeline_mode<synchronous>, transform_indices = @transform_1, window_bounds = array<i64: 320, 160>}, {pipeline_mode = #tpu.pipeline_mode<synchronous>, transform_indices = @transform_2, window_bounds = array<i64: 160, 64>}, {pipeline_mode = #tpu.pipeline_mode<synchronous>, transform_indices = @transform_3, window_bounds = array<i64: 64, 32>}, {pipeline_mode = #tpu.pipeline_mode<synchronous>, transform_indices = @transform_4, window_bounds = array<i64: 32, 16>}, {pipeline_mode = #tpu.pipeline_mode<synchronous>, transform_indices = @transform_5, window_bounds = array<i64: 16, 10>}, {transform_indices = @transform_6, window_bounds = array<i64: 8, 10>}]} {
    %c0 = arith.constant 0 : index
    %c0_0 = arith.constant 0 : index
    %0 = vector.load %arg1[%c0, %c0_0] : memref<8x320xbf16, #tpu.memory_space<vmem>>, vector<8x320xbf16>
    %c0_1 = arith.constant 0 : index
    %c0_2 = arith.constant 0 : index
    %1 = vector.load %arg2[%c0_1, %c0_2] : memref<320x160xbf16, #tpu.memory_space<vmem>>, vector<320x160xbf16>
    %cst = arith.constant dense<0.000000e+00> : vector<8x160xf32>
    %2 = tpu.matmul %0, %1, %cst {dimension_numbers = #tpu.dot_dimension_numbers<[1], [0], [0], [1], [0, 0, 1, 1], [], []>} : vector<8x320xbf16>, vector<320x160xbf16>, vector<8x160xf32> -> vector<8x160xf32>
    %cst_3 = arith.constant 0.000000e+00 : f32
    %3 = vector.broadcast %cst_3 : f32 to vector<8x160xf32>
    %4 = arith.maximumf %2, %3 : vector<8x160xf32>
    %5 = arith.truncf %4 : vector<8x160xf32> to vector<8x160xbf16>
    %c0_4 = arith.constant 0 : index
    %c0_5 = arith.constant 0 : index
    %6 = vector.load %arg3[%c0_4, %c0_5] : memref<160x64xbf16, #tpu.memory_space<vmem>>, vector<160x64xbf16>
    %cst_6 = arith.constant dense<0.000000e+00> : vector<8x64xf32>
    %7 = tpu.matmul %5, %6, %cst_6 {dimension_numbers = #tpu.dot_dimension_numbers<[1], [0], [0], [1], [0, 0, 1, 1], [], []>} : vector<8x160xbf16>, vector<160x64xbf16>, vector<8x64xf32> -> vector<8x64xf32>
    %cst_7 = arith.constant 0.000000e+00 : f32
    %8 = vector.broadcast %cst_7 : f32 to vector<8x64xf32>
    %9 = arith.maximumf %7, %8 : vector<8x64xf32>
    %10 = arith.truncf %9 : vector<8x64xf32> to vector<8x64xbf16>
    %c0_8 = arith.constant 0 : index
    %c0_9 = arith.constant 0 : index
    %11 = vector.load %arg4[%c0_8, %c0_9] : memref<64x32xbf16, #tpu.memory_space<vmem>>, vector<64x32xbf16>
    %cst_10 = arith.constant dense<0.000000e+00> : vector<8x32xf32>
    %12 = tpu.matmul %10, %11, %cst_10 {dimension_numbers = #tpu.dot_dimension_numbers<[1], [0], [0], [1], [0, 0, 1, 1], [], []>} : vector<8x64xbf16>, vector<64x32xbf16>, vector<8x32xf32> -> vector<8x32xf32>
    %cst_11 = arith.constant 0.000000e+00 : f32
    %13 = vector.broadcast %cst_11 : f32 to vector<8x32xf32>
    %14 = arith.maximumf %12, %13 : vector<8x32xf32>
    %15 = arith.truncf %14 : vector<8x32xf32> to vector<8x32xbf16>
    %c0_12 = arith.constant 0 : index
    %c0_13 = arith.constant 0 : index
    %16 = vector.load %arg5[%c0_12, %c0_13] : memref<32x16xbf16, #tpu.memory_space<vmem>>, vector<32x16xbf16>
    %cst_14 = arith.constant dense<0.000000e+00> : vector<8x16xf32>
    %17 = tpu.matmul %15, %16, %cst_14 {dimension_numbers = #tpu.dot_dimension_numbers<[1], [0], [0], [1], [0, 0, 1, 1], [], []>} : vector<8x32xbf16>, vector<32x16xbf16>, vector<8x16xf32> -> vector<8x16xf32>
    %cst_15 = arith.constant 0.000000e+00 : f32
    %18 = vector.broadcast %cst_15 : f32 to vector<8x16xf32>
    %19 = arith.maximumf %17, %18 : vector<8x16xf32>
    %20 = arith.truncf %19 : vector<8x16xf32> to vector<8x16xbf16>
    %c0_16 = arith.constant 0 : index
    %c0_17 = arith.constant 0 : index
    %21 = vector.load %arg6[%c0_16, %c0_17] : memref<16x10xbf16, #tpu.memory_space<vmem>>, vector<16x10xbf16>
    %cst_18 = arith.constant dense<0.000000e+00> : vector<8x10xf32>
    %22 = tpu.matmul %20, %21, %cst_18 {dimension_numbers = #tpu.dot_dimension_numbers<[1], [0], [0], [1], [0, 0, 1, 1], [], []>} : vector<8x16xbf16>, vector<16x10xbf16>, vector<8x10xf32> -> vector<8x10xf32>
    %cst_19 = arith.constant 0.000000e+00 : f32
    %23 = vector.broadcast %cst_19 : f32 to vector<8x10xf32>
    %24 = arith.maximumf %22, %23 : vector<8x10xf32>
    %cst_20 = arith.constant dense<0xFF800000> : vector<8xf32>
    %25 = vector.multi_reduction <maximumf>, %24, %cst_20 [1] : vector<8x10xf32> to vector<8xf32>
    %26 = vector.shape_cast %25 : vector<8xf32> to vector<8x1xf32>
    %27 = vector.broadcast %26 : vector<8x1xf32> to vector<8x10xf32>
    %28 = arith.subf %24, %27 : vector<8x10xf32>
    %29 = math.exp %28 : vector<8x10xf32>
    %cst_21 = arith.constant dense<0.000000e+00> : vector<8xf32>
    %30 = vector.multi_reduction <add>, %29, %cst_21 [1] : vector<8x10xf32> to vector<8xf32>
    %31 = vector.shape_cast %30 : vector<8xf32> to vector<8x1xf32>
    %32 = math.log %31 : vector<8x1xf32>
    %33 = vector.broadcast %32 : vector<8x1xf32> to vector<8x10xf32>
    %34 = arith.subf %28, %33 : vector<8x10xf32>
    %c0_22 = arith.constant 0 : index
    %c0_23 = arith.constant 0 : index
    %35 = vector.load %arg7[%c0_22, %c0_23] : memref<8x10xf32, #tpu.memory_space<vmem>>, vector<8x10xf32>
    tpu.vector_store %arg7[%c0_22, %c0_23], %34 {strides = array<i32>} : memref<8x10xf32, #tpu.memory_space<vmem>>, vector<8x10xf32>,
    return
  }
  func.func @transform_0(%arg0: i32) -> (i32, i32) {
    %c0_i32 = arith.constant 0 : i32
    %c0_i32_0 = arith.constant 0 : i32
    return %arg0, %c0_i32 : i32, i32
  }
  func.func @transform_1(%arg0: i32) -> (i32, i32) {
    %c0_i32 = arith.constant 0 : i32
    %c0_i32_0 = arith.constant 0 : i32
    %c0_i32_1 = arith.constant 0 : i32
    return %c0_i32, %c0_i32_0 : i32, i32
  }
  func.func @transform_2(%arg0: i32) -> (i32, i32) {
    %c0_i32 = arith.constant 0 : i32
    %c0_i32_0 = arith.constant 0 : i32
    %c0_i32_1 = arith.constant 0 : i32
    return %c0_i32, %c0_i32_0 : i32, i32
  }
  func.func @transform_3(%arg0: i32) -> (i32, i32) {
    %c0_i32 = arith.constant 0 : i32
    %c0_i32_0 = arith.constant 0 : i32
    %c0_i32_1 = arith.constant 0 : i32
    return %c0_i32, %c0_i32_0 : i32, i32
  }
  func.func @transform_4(%arg0: i32) -> (i32, i32) {
    %c0_i32 = arith.constant 0 : i32
    %c0_i32_0 = arith.constant 0 : i32
    %c0_i32_1 = arith.constant 0 : i32
    return %c0_i32, %c0_i32_0 : i32, i32
  }
  func.func @transform_5(%arg0: i32) -> (i32, i32) {
    %c0_i32 = arith.constant 0 : i32
    %c0_i32_0 = arith.constant 0 : i32
    %c0_i32_1 = arith.constant 0 : i32
    return %c0_i32, %c0_i32_0 : i32, i32
  }
  func.func @transform_6(%arg0: i32) -> (i32, i32) {
    %c0_i32 = arith.constant 0 : i32
    %c0_i32_0 = arith.constant 0 : i32
    return %arg0, %c0_i32 : i32, i32
  }
}

</mosaic_0001>

<llo_original>
// kernel: medium_forward.1
$region0: #{medium_forward.1}
  #allocation0 [shape = 'u32[]', space=smem, size = 0x4, offset = 0x4, fixed_abs, tag = 'smem constant byte address 0x4 - core index']
  #allocation1 [shape = 'u32[144,128]{1,0:T(1,128)}', space=vmem, size = 0x12000, scoped, tag = 'internal scratch']
  %s0 = inlined_call_operand.vmem [shape: bf16[8,320], index: 0, kind: input, shape index: {}]
  %s1 = inlined_call_operand.vmem [shape: bf16[320,160], index: 1, kind: input, shape index: {}]
  %s2 = inlined_call_operand.vmem [shape: bf16[160,64], index: 2, kind: input, shape index: {}]
  %s3 = inlined_call_operand.vmem [shape: bf16[64,32], index: 3, kind: input, shape index: {}]
  %s4 = inlined_call_operand.vmem [shape: bf16[32,16], index: 4, kind: input, shape index: {}]
  %s5 = inlined_call_operand.vmem [shape: bf16[16,10], index: 5, kind: input, shape index: {}]
  %s6 = inlined_call_operand.hbm [shape: f32[8,10], index: 6, kind: output, shape index: {}]
  %s7 = sld [smem:[#allocation0]]
  $region34: #{medium_forward.1} parent=0
    _
  %s9 = ssub.s32 1, %s7
  %s10 = scalar_select 0, %s9, %s7
  $region1: #{medium_forward.1} parent=0
    #allocation2 [shape = 'u8[4096]{0}', space=vmem, size = 0x1000, scoped, tag = 'output window, operand 0, single buffered']
    #allocation3 [shape = 's32[1]{0}', space=sflag, size = 0x4, scoped, tag = 'scoped memory for medium_forward.1']
    %11 = vsyncpa [#allocation3], 0
    // Predicated region
    $region2: #{medium_forward.1} parent=1 // pred_check
      _
    $region3: #{medium_forward.1} parent=1 // pred_check_branch
      %13 = sbr.rel (0) target = $region5
    $region4: #{medium_forward.1} parent=1 // pred_region
      _
    $region5: #{medium_forward.1} parent=1 // pred_fallthru
      _
    // Predicated region
    $region6: #{medium_forward.1} parent=1 // pred_check
      _
    $region7: #{medium_forward.1} parent=1 // pred_check_branch
      %15 = sbr.rel (0) target = $region9
    $region8: #{medium_forward.1} parent=1 // pred_region
      _
    $region9: #{medium_forward.1} parent=1 // pred_fallthru
      _
    // Predicated region
    $region10: #{medium_forward.1} parent=1 // pred_check
      _
    $region11: #{medium_forward.1} parent=1 // pred_check_branch
      %17 = sbr.rel (0) target = $region13
    $region12: #{medium_forward.1} parent=1 // pred_region
      _
    $region13: #{medium_forward.1} parent=1 // pred_fallthru
      _
    // Predicated region
    $region14: #{medium_forward.1} parent=1 // pred_check
      _
    $region15: #{medium_forward.1} parent=1 // pred_check_branch
      %19 = sbr.rel (0) target = $region17
    $region16: #{medium_forward.1} parent=1 // pred_region
      _
    $region17: #{medium_forward.1} parent=1 // pred_fallthru
      _
    // Predicated region
    $region18: #{medium_forward.1} parent=1 // pred_check
      _
    $region19: #{medium_forward.1} parent=1 // pred_check_branch
      %21 = sbr.rel (0) target = $region21
    $region20: #{medium_forward.1} parent=1 // pred_region
      _
    $region21: #{medium_forward.1} parent=1 // pred_fallthru
      _
    // Predicated region
    $region22: #{medium_forward.1} parent=1 // pred_check
      _
    $region23: #{medium_forward.1} parent=1 // pred_check_branch
      %23 = sbr.rel (0) target = $region25
    $region24: #{medium_forward.1} parent=1 // pred_region
      _
    $region25: #{medium_forward.1} parent=1 // pred_fallthru
      _
    %v25 = vld [vmem:[%s0] sm:$0xff]
    %v26 = vld [vmem:[%s0 + $0x8] sm:$0xf]
    %v27 = vld [vmem:[%s1] sm:$0xff]
    %v28 = vld [vmem:[%s1 + $0x8] sm:$0xff]
    %v29 = vld [vmem:[%s1 + $0x10] sm:$0xff]
    %v30 = vld [vmem:[%s1 + $0x18] sm:$0xff]
    %v31 = vld [vmem:[%s1 + $0x20] sm:$0xff]
    %v32 = vld [vmem:[%s1 + $0x28] sm:$0xff]
    %v33 = vld [vmem:[%s1 + $0x30] sm:$0xff]
    %v34 = vld [vmem:[%s1 + $0x38] sm:$0xff]
    %v35 = vld [vmem:[%s1 + $0x40] sm:$0xff]
    %v36 = vld [vmem:[%s1 + $0x48] sm:$0xff]
    %v37 = vld [vmem:[%s1 + $0x50] sm:$0xff]
    %v38 = vld [vmem:[%s1 + $0x58] sm:$0xff]
    %v39 = vld [vmem:[%s1 + $0x60] sm:$0xff]
    %v40 = vld [vmem:[%s1 + $0x68] sm:$0xff]
    %v41 = vld [vmem:[%s1 + $0x70] sm:$0xff]
    %v42 = vld [vmem:[%s1 + $0x78] sm:$0xff]
    %v43 = vld [vmem:[%s1 + $0x80] sm:$0xff]
    %v44 = vld [vmem:[%s1 + $0x88] sm:$0xff]
    %v45 = vld [vmem:[%s1 + $0x90] sm:$0xff]
    %v46 = vld [vmem:[%s1 + $0x98] sm:$0xff]
    %v47 = vld [vmem:[%s1 + $0xa0] sm:$0xff]
    %v48 = vld [vmem:[%s1 + $0xa8] sm:$0xff]
    %v49 = vld [vmem:[%s1 + $0xb0] sm:$0xff]
    %v50 = vld [vmem:[%s1 + $0xb8] sm:$0xff]
    %v51 = vld [vmem:[%s1 + $0xc0] sm:$0xff]
    %v52 = vld [vmem:[%s1 + $0xc8] sm:$0xff]
    %v53 = vld [vmem:[%s1 + $0xd0] sm:$0xff]
    %v54 = vld [vmem:[%s1 + $0xd8] sm:$0xff]
    %v55 = vld [vmem:[%s1 + $0xe0] sm:$0xff]
    %v56 = vld [vmem:[%s1 + $0xe8] sm:$0xff]
    %v57 = vld [vmem:[%s1 + $0xf0] sm:$0xff]
    %v58 = vld [vmem:[%s1 + $0xf8] sm:$0xff]
    %v59 = vld [vmem:[%s1 + $0x100] sm:$0xff]
    %v60 = vld [vmem:[%s1 + $0x108] sm:$0xff]
    %v61 = vld [vmem:[%s1 + $0x110] sm:$0xff]
    %v62 = vld [vmem:[%s1 + $0x118] sm:$0xff]
    %v63 = vld [vmem:[%s1 + $0x120] sm:$0xff]
    %v64 = vld [vmem:[%s1 + $0x128] sm:$0xff]
    %v65 = vld [vmem:[%s1 + $0x130] sm:$0xff]
    %v66 = vld [vmem:[%s1 + $0x138] sm:$0xff]
    %v69 = vunpack.c.l.b16 %v25
    %v70 = vunpack.c.h.b16 %v25
    %v71 = vunpack.c.l.b16 %v26
    %v72 = vpack.c.b16 %v69, %v69
    %v73 = vpack.c.b16 %v70, %v70
    %v74 = vpack.c.b16 %v71, %v71
    %v117 = vunpack.c.l.b16 %v27
    %v118 = vunpack.c.h.b16 %v27
    %v119 = vunpack.c.l.b16 %v28
    %v120 = vunpack.c.h.b16 %v28
    %v121 = vunpack.c.l.b16 %v29
    %v122 = vunpack.c.h.b16 %v29
    %v123 = vunpack.c.l.b16 %v30
    %v124 = vunpack.c.h.b16 %v30
    %v125 = vunpack.c.l.b16 %v31
    %v126 = vunpack.c.h.b16 %v31
    %v127 = vunpack.c.l.b16 %v32
    %v128 = vunpack.c.h.b16 %v32
    %v129 = vunpack.c.l.b16 %v33
    %v130 = vunpack.c.h.b16 %v33
    %v131 = vunpack.c.l.b16 %v34
    %v132 = vunpack.c.h.b16 %v34
    %v133 = vunpack.c.l.b16 %v35
    %v134 = vunpack.c.h.b16 %v35
    %v135 = vunpack.c.l.b16 %v36
    %v136 = vunpack.c.h.b16 %v36
    %v137 = vunpack.c.l.b16 %v37
    %v138 = vunpack.c.h.b16 %v37
    %v139 = vunpack.c.l.b16 %v38
    %v140 = vunpack.c.h.b16 %v38
    %v141 = vunpack.c.l.b16 %v39
    %v142 = vunpack.c.h.b16 %v39
    %v143 = vunpack.c.l.b16 %v40
    %v144 = vunpack.c.h.b16 %v40
    %v145 = vunpack.c.l.b16 %v41
    %v146 = vunpack.c.h.b16 %v41
    %v147 = vunpack.c.l.b16 %v42
    %v148 = vunpack.c.h.b16 %v42
    %v149 = vunpack.c.l.b16 %v43
    %v150 = vunpack.c.h.b16 %v43
    %v151 = vunpack.c.l.b16 %v44
    %v152 = vunpack.c.h.b16 %v44
    %v153 = vunpack.c.l.b16 %v45
    %v154 = vunpack.c.h.b16 %v45
    %v155 = vunpack.c.l.b16 %v46
    %v156 = vunpack.c.h.b16 %v46
    %v157 = vunpack.c.l.b16 %v47
    %v158 = vunpack.c.h.b16 %v47
    %v159 = vunpack.c.l.b16 %v48
    %v160 = vunpack.c.h.b16 %v48
    %v161 = vunpack.c.l.b16 %v49
    %v162 = vunpack.c.h.b16 %v49
    %v163 = vunpack.c.l.b16 %v50
    %v164 = vunpack.c.h.b16 %v50
    %v165 = vunpack.c.l.b16 %v51
    %v166 = vunpack.c.h.b16 %v51
    %v167 = vunpack.c.l.b16 %v52
    %v168 = vunpack.c.h.b16 %v52
    %v169 = vunpack.c.l.b16 %v53
    %v170 = vunpack.c.h.b16 %v53
    %v171 = vunpack.c.l.b16 %v54
    %v172 = vunpack.c.h.b16 %v54
    %v173 = vunpack.c.l.b16 %v55
    %v174 = vunpack.c.h.b16 %v55
    %v175 = vunpack.c.l.b16 %v56
    %v176 = vunpack.c.h.b16 %v56
    %v177 = vunpack.c.l.b16 %v57
    %v178 = vunpack.c.h.b16 %v57
    %v179 = vunpack.c.l.b16 %v58
    %v180 = vunpack.c.h.b16 %v58
    %v181 = vunpack.c.l.b16 %v59
    %v182 = vunpack.c.h.b16 %v59
    %v183 = vunpack.c.l.b16 %v60
    %v184 = vunpack.c.h.b16 %v60
    %v185 = vunpack.c.l.b16 %v61
    %v186 = vunpack.c.h.b16 %v61
    %v187 = vunpack.c.l.b16 %v62
    %v188 = vunpack.c.h.b16 %v62
    %v189 = vunpack.c.l.b16 %v63
    %v190 = vunpack.c.h.b16 %v63
    %v191 = vunpack.c.l.b16 %v64
    %v192 = vunpack.c.h.b16 %v64
    %v193 = vunpack.c.l.b16 %v65
    %v194 = vunpack.c.h.b16 %v65
    %v195 = vunpack.c.l.b16 %v66
    %v196 = vunpack.c.h.b16 %v66
    %v197 = vpack.c.b16 %v119, %v117
    %v198 = vpack.c.b16 %v120, %v118
    %v199 = vpack.c.b16 %v123, %v121
    %v200 = vpack.c.b16 %v124, %v122
    %v201 = vpack.c.b16 %v127, %v125
    %v202 = vpack.c.b16 %v128, %v126
    %v203 = vpack.c.b16 %v131, %v129
    %v204 = vpack.c.b16 %v132, %v130
    %v205 = vpack.c.b16 %v135, %v133
    %v206 = vpack.c.b16 %v136, %v134
    %v207 = vpack.c.b16 %v139, %v137
    %v208 = vpack.c.b16 %v140, %v138
    %v209 = vpack.c.b16 %v143, %v141
    %v210 = vpack.c.b16 %v144, %v142
    %v211 = vpack.c.b16 %v147, %v145
    %v212 = vpack.c.b16 %v148, %v146
    %v213 = vpack.c.b16 %v151, %v149
    %v214 = vpack.c.b16 %v152, %v150
    %v215 = vpack.c.b16 %v155, %v153
    %v216 = vpack.c.b16 %v156, %v154
    %v217 = vpack.c.b16 %v159, %v157
    %v218 = vpack.c.b16 %v160, %v158
    %v219 = vpack.c.b16 %v163, %v161
    %v220 = vpack.c.b16 %v164, %v162
    %v221 = vpack.c.b16 %v167, %v165
    %v222 = vpack.c.b16 %v168, %v166
    %v223 = vpack.c.b16 %v171, %v169
    %v224 = vpack.c.b16 %v172, %v170
    %v225 = vpack.c.b16 %v175, %v173
    %v226 = vpack.c.b16 %v176, %v174
    %v227 = vpack.c.b16 %v179, %v177
    %v228 = vpack.c.b16 %v180, %v178
    %v229 = vpack.c.b16 %v183, %v181
    %v230 = vpack.c.b16 %v184, %v182
    %v231 = vpack.c.b16 %v187, %v185
    %v232 = vpack.c.b16 %v188, %v186
    %v233 = vpack.c.b16 %v191, %v189
    %v234 = vpack.c.b16 %v192, %v190
    %v235 = vpack.c.b16 %v195, %v193
    %v236 = vpack.c.b16 %v196, %v194
    %vm277 = vcmask 523264
    %v279 = vsel %vm277, %v74, 0
    %281 = vmatprep.subr.bf16.mxu0 %v198
    %282 = vmatpush1.bf16.msra.mxu0 %v197
    %283 = vmatprep.subr.bf16.mxu0 %v200
    %284 = vmatpush1.bf16.msra.mxu0 %v199
    %285 = vmatprep.subr.bf16.mxu0 %v202
    %286 = vmatpush1.bf16.msra.mxu0 %v201
    %287 = vmatprep.subr.bf16.mxu0 %v204
    %288 = vmatpush1.bf16.msra.mxu0 %v203
    %289 = vmatprep.subr.bf16.mxu0 %v206
    %290 = vmatpush1.bf16.msra.mxu0 %v205
    %291 = vmatprep.subr.bf16.mxu0 %v208
    %292 = vmatpush1.bf16.msra.mxu0 %v207
    %293 = vmatprep.subr.bf16.mxu0 %v210
    %294 = vmatpush1.bf16.msra.mxu0 %v209
    %295 = vmatprep.subr.bf16.mxu0 %v212
    %296 = vmatpush1.bf16.msra.mxu0 %v211
    %297 = vmatprep.subr.bf16.mxu0 %v214
    %298 = vmatpush1.bf16.msra.mxu0 %v213
    %299 = vmatprep.subr.bf16.mxu0 %v216
    %300 = vmatpush1.bf16.msra.mxu0 %v215
    %301 = vmatprep.subr.bf16.mxu0 %v218
    %302 = vmatpush1.bf16.msra.mxu0 %v217
    %303 = vmatprep.subr.bf16.mxu0 %v220
    %304 = vmatpush1.bf16.msra.mxu0 %v219
    %305 = vmatprep.subr.bf16.mxu0 %v222
    %306 = vmatpush1.bf16.msra.mxu0 %v221
    %307 = vmatprep.subr.bf16.mxu0 %v224
    %308 = vmatpush1.bf16.msra.mxu0 %v223
    %309 = vmatprep.subr.bf16.mxu0 %v226
    %310 = vmatpush1.bf16.msra.mxu0 %v225
    %311 = vmatprep.subr.bf16.mxu0 %v228
    %312 = vmatpush1.bf16.msra.mxu0 %v227
    %313 = vmatprep.mubr.bf16.mxu0 %v73
    %314 = vmatmul.mubr.bf16.gmra.mrb[0].mxu0 %v72
    %v315 = vpop.f32.mrb[0].mxu0
    %v316 = vadd.f32 0.0, %v315
    %v317 = vpop.f32.mrb[0].mxu0
    %v318 = vadd.f32 0.0, %v317
    %v319 = vpop.f32.mrb[0].mxu0
    %v320 = vpop.f32.mrb[0].mxu0
    %321 = vdwg.mxu0
    %322 = vmatprep.subr.bf16.mxu0 %v230
    %323 = vmatpush1.bf16.msra.mxu0 %v229
    %324 = vmatprep.subr.bf16.mxu0 %v232
    %325 = vmatpush1.bf16.msra.mxu0 %v231
    %326 = vmatprep.subr.bf16.mxu0 %v234
    %327 = vmatpush1.bf16.msra.mxu0 %v233
    %328 = vmatprep.subr.bf16.mxu0 %v236
    %329 = vmatpush1.bf16.msra.mxu0 %v235
    %330 = vmatprep.subr.bf16.mxu0 0
    %331 = vmatpush1.bf16.msra.mxu0 0
    %332 = vmatprep.subr.bf16.mxu0 0
    %333 = vmatpush1.bf16.msra.mxu0 0
    %334 = vmatprep.subr.bf16.mxu0 0
    %335 = vmatpush1.bf16.msra.mxu0 0
    %336 = vmatprep.subr.bf16.mxu0 0
    %337 = vmatpush1.bf16.msra.mxu0 0
    %338 = vmatprep.subr.bf16.mxu0 0
    %339 = vmatpush1.bf16.msra.mxu0 0
    %340 = vmatprep.subr.bf16.mxu0 0
    %341 = vmatpush1.bf16.msra.mxu0 0
    %342 = vmatprep.subr.bf16.mxu0 0
    %343 = vmatpush1.bf16.msra.mxu0 0
    %344 = vmatprep.subr.bf16.mxu0 0
    %345 = vmatpush1.bf16.msra.mxu0 0
    %346 = vmatprep.subr.bf16.mxu0 0
    %347 = vmatpush1.bf16.msra.mxu0 0
    %348 = vmatprep.subr.bf16.mxu0 0
    %349 = vmatpush1.bf16.msra.mxu0 0
    %350 = vmatprep.subr.bf16.mxu0 0
    %351 = vmatpush1.bf16.msra.mxu0 0
    %352 = vmatprep.subr.bf16.mxu0 0
    %353 = vmatpush1.bf16.msra.mxu0 0
    %354 = vmatprep.mubr.bf16.mxu0 0
    %355 = vmatmul.mubr.bf16.gmra.mrb[0].mxu0 %v279
    %v356 = vpop.f32.mrb[0].mxu0
    %v357 = vadd.f32 %v316, %v356
    %v358 = vpop.f32.mrb[0].mxu0
    %v359 = vadd.f32 %v318, %v358
    %v360 = vpop.f32.mrb[0].mxu0
    %v361 = vpop.f32.mrb[0].mxu0
    %362 = vdwg.mxu0
    %v363 = vmax.f32 %v357, 0.0
    %v364 = vmax.f32 %v359, 0.0
    %v365 = vpack.c.bf16 %v363, %v363
    %v366 = vpack.c.bf16 %v364, %v364
    %v367 = vld [vmem:[%s2] sm:$0xf]
    %v368 = vld [vmem:[%s2 + $0x4] sm:$0xf]
    %v369 = vld [vmem:[%s2 + $0x8] sm:$0xf]
    %v370 = vld [vmem:[%s2 + $0xc] sm:$0xf]
    %v371 = vld [vmem:[%s2 + $0x10] sm:$0xf]
    %v372 = vld [vmem:[%s2 + $0x14] sm:$0xf]
    %v373 = vld [vmem:[%s2 + $0x18] sm:$0xf]
    %v374 = vld [vmem:[%s2 + $0x1c] sm:$0xf]
    %v375 = vld [vmem:[%s2 + $0x20] sm:$0xf]
    %v376 = vld [vmem:[%s2 + $0x24] sm:$0xf]
    %v377 = vld [vmem:[%s2 + $0x28] sm:$0xf]
    %v378 = vld [vmem:[%s2 + $0x2c] sm:$0xf]
    %v379 = vld [vmem:[%s2 + $0x30] sm:$0xf]
    %v380 = vld [vmem:[%s2 + $0x34] sm:$0xf]
    %v381 = vld [vmem:[%s2 + $0x38] sm:$0xf]
    %v382 = vld [vmem:[%s2 + $0x3c] sm:$0xf]
    %v383 = vld [vmem:[%s2 + $0x40] sm:$0xf]
    %v384 = vld [vmem:[%s2 + $0x44] sm:$0xf]
    %v385 = vld [vmem:[%s2 + $0x48] sm:$0xf]
    %v386 = vld [vmem:[%s2 + $0x4c] sm:$0xf]
    %v407 = vunpack.c.l.b16 %v367
    %v408 = vunpack.c.l.b16 %v368
    %v409 = vunpack.c.l.b16 %v369
    %v410 = vunpack.c.l.b16 %v370
    %v411 = vunpack.c.l.b16 %v371
    %v412 = vunpack.c.l.b16 %v372
    %v413 = vunpack.c.l.b16 %v373
    %v414 = vunpack.c.l.b16 %v374
    %v415 = vunpack.c.l.b16 %v375
    %v416 = vunpack.c.l.b16 %v376
    %v417 = vunpack.c.l.b16 %v377
    %v418 = vunpack.c.l.b16 %v378
    %v419 = vunpack.c.l.b16 %v379
    %v420 = vunpack.c.l.b16 %v380
    %v421 = vunpack.c.l.b16 %v381
    %v422 = vunpack.c.l.b16 %v382
    %v423 = vunpack.c.l.b16 %v383
    %v424 = vunpack.c.l.b16 %v384
    %v425 = vunpack.c.l.b16 %v385
    %v426 = vunpack.c.l.b16 %v386
    %v427 = vpack.c.b16 %v408, %v407
    %v428 = vpack.c.b16 %v410, %v409
    %v429 = vpack.c.b16 %v412, %v411
    %v430 = vpack.c.b16 %v414, %v413
    %v431 = vpack.c.b16 %v416, %v415
    %v432 = vpack.c.b16 %v418, %v417
    %v433 = vpack.c.b16 %v420, %v419
    %v434 = vpack.c.b16 %v422, %v421
    %v435 = vpack.c.b16 %v424, %v423
    %v436 = vpack.c.b16 %v426, %v425
    %vm447 = vcmask 261120
    %v449 = vsel %vm447, %v366, 0
    %451 = vmatprep.subr.bf16.mxu0 0
    %452 = vmatpush1.bf16.msra.mxu0 %v427
    %453 = vmatprep.subr.bf16.mxu0 0
    %454 = vmatpush1.bf16.msra.mxu0 %v428
    %455 = vmatprep.subr.bf16.mxu0 0
    %456 = vmatpush1.bf16.msra.mxu0 %v429
    %457 = vmatprep.subr.bf16.mxu0 0
    %458 = vmatpush1.bf16.msra.mxu0 %v430
    %459 = vmatprep.subr.bf16.mxu0 0
    %460 = vmatpush1.bf16.msra.mxu0 %v431
    %461 = vmatprep.subr.bf16.mxu0 0
    %462 = vmatpush1.bf16.msra.mxu0 %v432
    %463 = vmatprep.subr.bf16.mxu0 0
    %464 = vmatpush1.bf16.msra.mxu0 %v433
    %465 = vmatprep.subr.bf16.mxu0 0
    %466 = vmatpush1.bf16.msra.mxu0 %v434
    %467 = vmatprep.subr.bf16.mxu0 0
    %468 = vmatpush1.bf16.msra.mxu0 %v435
    %469 = vmatprep.subr.bf16.mxu0 0
    %470 = vmatpush1.bf16.msra.mxu0 %v436
    %471 = vmatprep.subr.bf16.mxu0 0
    %472 = vmatpush1.bf16.msra.mxu0 0
    %473 = vmatprep.subr.bf16.mxu0 0
    %474 = vmatpush1.bf16.msra.mxu0 0
    %475 = vmatprep.subr.bf16.mxu0 0
    %476 = vmatpush1.bf16.msra.mxu0 0
    %477 = vmatprep.subr.bf16.mxu0 0
    %478 = vmatpush1.bf16.msra.mxu0 0
    %479 = vmatprep.subr.bf16.mxu0 0
    %480 = vmatpush1.bf16.msra.mxu0 0
    %481 = vmatprep.subr.bf16.mxu0 0
    %482 = vmatpush1.bf16.msra.mxu0 0
    %483 = vmatprep.mubr.bf16.mxu0 %v449
    %484 = vmatmul.mubr.bf16.gmra.mrb[0].mxu0 %v365
    %v485 = vpop.f32.mrb[0].mxu0
    %v486 = vadd.f32 0.0, %v485
    %v487 = vpop.f32.mrb[0].mxu0
    %v488 = vpop.f32.mrb[0].mxu0
    %v489 = vpop.f32.mrb[0].mxu0
    %490 = vdwg.mxu0
    %v491 = vmax.f32 %v486, 0.0
    %v492 = vpack.c.bf16 %v491, %v491
    %v493 = vld [vmem:[%s3] sm:$0xf]
    %v494 = vld [vmem:[%s3 + $0x4] sm:$0xf]
    %v495 = vld [vmem:[%s3 + $0x8] sm:$0xf]
    %v496 = vld [vmem:[%s3 + $0xc] sm:$0xf]
    %v497 = vld [vmem:[%s3 + $0x10] sm:$0xf]
    %v498 = vld [vmem:[%s3 + $0x14] sm:$0xf]
    %v499 = vld [vmem:[%s3 + $0x18] sm:$0xf]
    %v500 = vld [vmem:[%s3 + $0x1c] sm:$0xf]
    %v509 = vunpack.c.l.b16 %v493
    %v510 = vunpack.c.l.b16 %v494
    %v511 = vunpack.c.l.b16 %v495
    %v512 = vunpack.c.l.b16 %v496
    %v513 = vunpack.c.l.b16 %v497
    %v514 = vunpack.c.l.b16 %v498
    %v515 = vunpack.c.l.b16 %v499
    %v516 = vunpack.c.l.b16 %v500
    %v517 = vpack.c.b16 %v510, %v509
    %v518 = vpack.c.b16 %v512, %v511
    %v519 = vpack.c.b16 %v514, %v513
    %v520 = vpack.c.b16 %v516, %v515
    %v526 = vsel %vm277, %v492, 0
    %528 = vmatprep.subr.bf16.mxu0 0
    %529 = vmatpush1.bf16.msra.mxu0 %v517
    %530 = vmatprep.subr.bf16.mxu0 0
    %531 = vmatpush1.bf16.msra.mxu0 %v518
    %532 = vmatprep.subr.bf16.mxu0 0
    %533 = vmatpush1.bf16.msra.mxu0 %v519
    %534 = vmatprep.subr.bf16.mxu0 0
    %535 = vmatpush1.bf16.msra.mxu0 %v520
    %536 = vmatprep.subr.bf16.mxu0 0
    %537 = vmatpush1.bf16.msra.mxu0 0
    %538 = vmatprep.subr.bf16.mxu0 0
    %539 = vmatpush1.bf16.msra.mxu0 0
    %540 = vmatprep.subr.bf16.mxu0 0
    %541 = vmatpush1.bf16.msra.mxu0 0
    %542 = vmatprep.subr.bf16.mxu0 0
    %543 = vmatpush1.bf16.msra.mxu0 0
    %544 = vmatprep.subr.bf16.mxu0 0
    %545 = vmatpush1.bf16.msra.mxu0 0
    %546 = vmatprep.subr.bf16.mxu0 0
    %547 = vmatpush1.bf16.msra.mxu0 0
    %548 = vmatprep.subr.bf16.mxu0 0
    %549 = vmatpush1.bf16.msra.mxu0 0
    %550 = vmatprep.subr.bf16.mxu0 0
    %551 = vmatpush1.bf16.msra.mxu0 0
    %552 = vmatprep.subr.bf16.mxu0 0
    %553 = vmatpush1.bf16.msra.mxu0 0
    %554 = vmatprep.subr.bf16.mxu0 0
    %555 = vmatpush1.bf16.msra.mxu0 0
    %556 = vmatprep.subr.bf16.mxu0 0
    %557 = vmatpush1.bf16.msra.mxu0 0
    %558 = vmatprep.subr.bf16.mxu0 0
    %559 = vmatpush1.bf16.msra.mxu0 0
    %560 = vmatprep.mubr.bf16.mxu0 0
    %561 = vmatmul.mubr.bf16.gmra.mrb[0].mxu0 %v526
    %v562 = vpop.f32.mrb[0].mxu0
    %v563 = vadd.f32 0.0, %v562
    %v564 = vpop.f32.mrb[0].mxu0
    %v565 = vpop.f32.mrb[0].mxu0
    %v566 = vpop.f32.mrb[0].mxu0
    %567 = vdwg.mxu0
    %v568 = vmax.f32 %v563, 0.0
    %v569 = vpack.c.bf16 %v568, %v568
    %v570 = vld [vmem:[%s4] sm:$0xf]
    %v571 = vld [vmem:[%s4 + $0x4] sm:$0xf]
    %v572 = vld [vmem:[%s4 + $0x8] sm:$0xf]
    %v573 = vld [vmem:[%s4 + $0xc] sm:$0xf]
    %v578 = vunpack.c.l.b16 %v570
    %v579 = vunpack.c.l.b16 %v571
    %v580 = vunpack.c.l.b16 %v572
    %v581 = vunpack.c.l.b16 %v573
    %v582 = vpack.c.b16 %v579, %v578
    %v583 = vpack.c.b16 %v581, %v580
    %v587 = vsel %vm447, %v569, 0
    %589 = vmatprep.subr.bf16.mxu0 0
    %590 = vmatpush1.bf16.msra.mxu0 %v582
    %591 = vmatprep.subr.bf16.mxu0 0
    %592 = vmatpush1.bf16.msra.mxu0 %v583
    %593 = vmatprep.subr.bf16.mxu0 0
    %594 = vmatpush1.bf16.msra.mxu0 0
    %595 = vmatprep.subr.bf16.mxu0 0
    %596 = vmatpush1.bf16.msra.mxu0 0
    %597 = vmatprep.subr.bf16.mxu0 0
    %598 = vmatpush1.bf16.msra.mxu0 0
    %599 = vmatprep.subr.bf16.mxu0 0
    %600 = vmatpush1.bf16.msra.mxu0 0
    %601 = vmatprep.subr.bf16.mxu0 0
    %602 = vmatpush1.bf16.msra.mxu0 0
    %603 = vmatprep.subr.bf16.mxu0 0
    %604 = vmatpush1.bf16.msra.mxu0 0
    %605 = vmatprep.subr.bf16.mxu0 0
    %606 = vmatpush1.bf16.msra.mxu0 0
    %607 = vmatprep.subr.bf16.mxu0 0
    %608 = vmatpush1.bf16.msra.mxu0 0
    %609 = vmatprep.subr.bf16.mxu0 0
    %610 = vmatpush1.bf16.msra.mxu0 0
    %611 = vmatprep.subr.bf16.mxu0 0
    %612 = vmatpush1.bf16.msra.mxu0 0
    %613 = vmatprep.subr.bf16.mxu0 0
    %614 = vmatpush1.bf16.msra.mxu0 0
    %615 = vmatprep.subr.bf16.mxu0 0
    %616 = vmatpush1.bf16.msra.mxu0 0
    %617 = vmatprep.subr.bf16.mxu0 0
    %618 = vmatpush1.bf16.msra.mxu0 0
    %619 = vmatprep.subr.bf16.mxu0 0
    %620 = vmatpush1.bf16.msra.mxu0 0
    %621 = vmatprep.mubr.bf16.mxu0 0
    %622 = vmatmul.mubr.bf16.gmra.mrb[0].mxu0 %v587
    %v623 = vpop.f32.mrb[0].mxu0
    %v624 = vadd.f32 0.0, %v623
    %v625 = vpop.f32.mrb[0].mxu0
    %v626 = vpop.f32.mrb[0].mxu0
    %v627 = vpop.f32.mrb[0].mxu0
    %628 = vdwg.mxu0
    %v629 = vmax.f32 %v624, 0.0
    %v630 = vpack.c.bf16 %v629, %v629
    %v631 = vld [vmem:[%s5] sm:$0xf]
    %v632 = vld [vmem:[%s5 + $0x4] sm:$0xf]
    %v635 = vunpack.c.l.b16 %v631
    %v636 = vunpack.c.l.b16 %v632
    %v637 = vpack.c.b16 %v636, %v635
    %vm639 = vcmask 130048
    %v641 = vsel %vm639, %v630, 0
    %643 = vmatprep.subr.bf16.mxu0 0
    %644 = vmatpush1.bf16.msra.mxu0 %v637
    %645 = vmatprep.subr.bf16.mxu0 0
    %646 = vmatpush1.bf16.msra.mxu0 0
    %647 = vmatprep.subr.bf16.mxu0 0
    %648 = vmatpush1.bf16.msra.mxu0 0
    %649 = vmatprep.subr.bf16.mxu0 0
    %650 = vmatpush1.bf16.msra.mxu0 0
    %651 = vmatprep.subr.bf16.mxu0 0
    %652 = vmatpush1.bf16.msra.mxu0 0
    %653 = vmatprep.subr.bf16.mxu0 0
    %654 = vmatpush1.bf16.msra.mxu0 0
    %655 = vmatprep.subr.bf16.mxu0 0
    %656 = vmatpush1.bf16.msra.mxu0 0
    %657 = vmatprep.subr.bf16.mxu0 0
    %658 = vmatpush1.bf16.msra.mxu0 0
    %659 = vmatprep.subr.bf16.mxu0 0
    %660 = vmatpush1.bf16.msra.mxu0 0
    %661 = vmatprep.subr.bf16.mxu0 0
    %662 = vmatpush1.bf16.msra.mxu0 0
    %663 = vmatprep.subr.bf16.mxu0 0
    %664 = vmatpush1.bf16.msra.mxu0 0
    %665 = vmatprep.subr.bf16.mxu0 0
    %666 = vmatpush1.bf16.msra.mxu0 0
    %667 = vmatprep.subr.bf16.mxu0 0
    %668 = vmatpush1.bf16.msra.mxu0 0
    %669 = vmatprep.subr.bf16.mxu0 0
    %670 = vmatpush1.bf16.msra.mxu0 0
    %671 = vmatprep.subr.bf16.mxu0 0
    %672 = vmatpush1.bf16.msra.mxu0 0
    %673 = vmatprep.subr.bf16.mxu0 0
    %674 = vmatpush1.bf16.msra.mxu0 0
    %675 = vmatprep.mubr.bf16.mxu0 0
    %676 = vmatmul.mubr.bf16.gmra.mrb[0].mxu0 %v641
    %v677 = vpop.f32.mrb[0].mxu0
    %v678 = vadd.f32 0.0, %v677
    %v679 = vpop.f32.mrb[0].mxu0
    %v680 = vpop.f32.mrb[0].mxu0
    %v681 = vpop.f32.mrb[0].mxu0
    %682 = vdwg.mxu0
    %v683 = vmax.f32 %v678, 0.0
    %vm684 = vcmask 80896
    %v685 = vsel %vm684, %v683, -inf
    %686 = vmax.xlane.f32.xlu0 %v685
    %v687 = vpop.xlane.xlu0 %686
    %v688 = vsub.f32 %v683, %v687
    %v689 = vmul.f32 %v688, 1.442695
    %v690 = vpow.pop %v689
    %v691 = vsel %vm684, %v690, 0.0
    %692 = vadd.xlane.f32.xlu0 %v691
    %v693 = vpop.xlane.xlu0 %692
    %v694 = vlog2.pop %v693
    %v695 = vmul.f32 %v694, 0.6931472
    %v696 = vsub.f32 %v688, %v695
    %697 = vst.msk [vmem:[#allocation2] sm:$0xff] %vm684, %v696
    // Predicated region
    $region26: #{medium_forward.1} parent=1 // pred_check
      _
    $region27: #{medium_forward.1} parent=1 // pred_check_branch
      %699 = sbr.rel (0) target = $region29
    $region28: #{medium_forward.1} parent=1 // pred_region
      %s701 = ssub.s32 128, 128
      %702 = vsyncadd [#allocation3], %s701
      %s704 = sshll.u32 [#allocation2], 4
      %s705 = int_to_ptr.vmem [resolvable:$true] %s704
      %707 = dma.vmem_to_hbm [thread:$0]  %s705, 128, %s6, [#allocation3]
    $region29: #{medium_forward.1} parent=1 // pred_fallthru
      _
    // Predicated region
    $region30: #{medium_forward.1} parent=1 // pred_check
      _
    $region31: #{medium_forward.1} parent=1 // pred_check_branch
      %709 = sbr.rel (0) target = $region33
    $region32: #{medium_forward.1} parent=1 // pred_region
      %710 = dma.done [#allocation3], 128
    $region33: #{medium_forward.1} parent=1 // pred_fallthru
      _
    %711 = vsyncpa [#allocation3], 1

</llo_original>
